<compile_context>
chip_gen: v7x
topology: tpu7x:2x2x1
jax: 0.10.0
libtpu: 0.0.40
codegen_flags: <defaults>
</compile_context>

<pallas_src>
import functools

import jax
import jax.numpy as jnp
from jax.experimental import pallas as pl
from jax.experimental.pallas import tpu as pltpu


def _round_up(x, m):
    return ((x + m - 1) // m) * m


def _mf_kernel(uid_ref, iid_ref, u_tab_ref, i_tab_ref, o_ref):
    """One batch tile: gather TB user rows + TB item rows, multiply, reduce.

    Shapes (TB = batch tile, Dp = padded dim, NUp/NIp = padded table rows):
      uid_ref, iid_ref : (1, 1, TB)   int32    indices, batch on lanes
      u_tab_ref        : (Dp, NUp)    float32  user table^T (VMEM-resident)
      i_tab_ref        : (Dp, NIp)    float32  item table^T (VMEM-resident)
      o_ref            : (1, 1, TB)   float32  scores (lane-dense store)
    """
    tb = uid_ref.shape[-1]
    uids = uid_ref[...].reshape(1, tb)          # (1, TB), batch on lanes
    iids = iid_ref[...].reshape(1, tb)

    nu = u_tab_ref.shape[1]
    ni = i_tab_ref.shape[1]

    # One-hot gather matrices, batch on lanes: (rows, TB).  Row ids come from a
    # free in-kernel iota (no extra inputs / DMAs).  Padded table rows are all
    # zero and are never selected by valid indices.
    u_onehot = (jax.lax.broadcasted_iota(jnp.int32, (nu, tb), 0)
                == uids).astype(jnp.float32)
    i_onehot = (jax.lax.broadcasted_iota(jnp.int32, (ni, tb), 0)
                == iids).astype(jnp.float32)

    # MXU one-hot gather: exactly one 1.0 per lane column, f32 in / f32 out, so
    # each output column is the selected embedding row.
    u_rows = jnp.dot(u_tab_ref[...], u_onehot,
                     preferred_element_type=jnp.float32)    # (Dp, TB)
    i_rows = jnp.dot(i_tab_ref[...], i_onehot,
                     preferred_element_type=jnp.float32)    # (Dp, TB)

    # Multiply + reduce over the embedding dim (sublane axis) -> one unmasked
    # lane-dense (1, TB) slab per grid step.
    scores = jnp.sum(u_rows * i_rows, axis=0, keepdims=True)   # (1, TB)
    o_ref[...] = scores[None]


@functools.partial(jax.jit, static_argnames=("max_tile_b",))
def mf_forward(user_embedding, item_embedding, uid_batch, iid_batch, *,
               max_tile_b=1024):
    """Pallas MF forward: (B,) scores = sum(U[uid] * I[iid], axis=-1)."""
    num_users, dim = user_embedding.shape
    num_items, dim_i = item_embedding.shape
    assert dim == dim_i
    (batch,) = uid_batch.shape

    # Tile size: multiple of 128 (lane-dense output store), large enough to
    # amortize per-grid-step overhead, small enough that num_tiles >= 2 when
    # the batch allows it (so v7x's two TensorCores both get work).
    half_batch_tile = _round_up(max(pl.cdiv(batch, 2), 1), 128)
    tile_b = max(128, min(max_tile_b, half_batch_tile))

    num_tiles = pl.cdiv(batch, tile_b)
    b_pad = num_tiles * tile_b

    # Pad the batch to a tile multiple (padded lanes gather row 0 and are
    # sliced off) and lay the indices out as (tiles, 1, TB): batch on lanes.
    uid_p = jnp.pad(uid_batch.astype(jnp.int32), (0, b_pad - batch)).reshape(
        num_tiles, 1, tile_b)
    iid_p = jnp.pad(iid_batch.astype(jnp.int32), (0, b_pad - batch)).reshape(
        num_tiles, 1, tile_b)

    # Tables: cast to f32 once here (v5e VPU has no bf16 path), transpose to
    # (dim, rows) so the in-kernel gather is a direct MXU matmul with the
    # batch / table rows on lanes, and pad once to (8, 128)-aligned shapes.
    dim_pad = _round_up(dim, 8)
    nu_pad = _round_up(num_users, 128)
    ni_pad = _round_up(num_items, 128)
    u_tab_t = jnp.pad(user_embedding.astype(jnp.float32).T,
                      ((0, dim_pad - dim), (0, nu_pad - num_users)))
    i_tab_t = jnp.pad(item_embedding.astype(jnp.float32).T,
                      ((0, dim_pad - dim), (0, ni_pad - num_items)))

    # Rough VMEM budget: double-buffered resident tables + index/output tiles.
    table_vmem = 4 * 2 * dim_pad * (nu_pad + ni_pad)
    io_vmem = 4 * 2 * 3 * tile_b
    vmem_limit = int(min(64 * 1024 * 1024,
                         max(32 * 1024 * 1024,
                             table_vmem + io_vmem + (2 << 20))))

    cost = pl.CostEstimate(
        flops=2 * b_pad * dim_pad * (nu_pad + ni_pad + 1),
        transcendentals=0,
        bytes_accessed=4 * (num_users * dim + num_items * dim + 3 * b_pad),
    )

    out = pl.pallas_call(
        _mf_kernel,
        out_shape=jax.ShapeDtypeStruct((num_tiles, 1, tile_b), jnp.float32),
        grid=(num_tiles,),
        in_specs=[
            pl.BlockSpec((1, 1, tile_b), lambda t: (t, 0, 0)),     # uid tile
            pl.BlockSpec((1, 1, tile_b), lambda t: (t, 0, 0)),     # iid tile
            # Constant index_maps -> fetched once, VMEM-resident across steps.
            pl.BlockSpec((dim_pad, nu_pad), lambda t: (0, 0)),     # user table^T
            pl.BlockSpec((dim_pad, ni_pad), lambda t: (0, 0)),     # item table^T
        ],
        out_specs=pl.BlockSpec((1, 1, tile_b), lambda t: (t, 0, 0)),
        compiler_params=pltpu.CompilerParams(
            dimension_semantics=("parallel",),   # independent batch tiles
            vmem_limit_bytes=vmem_limit),
        cost_estimate=cost,
    )(uid_p, iid_p, u_tab_t, i_tab_t)

    return out.reshape(b_pad)[:batch]


if __name__ == "__main__":
    # Small shapes consistent with the module.
    num_users, num_items, dim = 16, 24, 32
    batch = 8

    key = jax.random.PRNGKey(0)
    k_u, k_i, k_uid, k_iid = jax.random.split(key, 4)

    # torch.normal(mean=0, std=1) analogue.
    user_embedding = jax.random.normal(k_u, (num_users, dim), dtype=jnp.float32)
    item_embedding = jax.random.normal(k_i, (num_items, dim), dtype=jnp.float32)

    uid_batch = jax.random.randint(k_uid, (batch,), 0, num_users, dtype=jnp.int32)
    iid_batch = jax.random.randint(k_iid, (batch,), 0, num_items, dtype=jnp.int32)

    scores = mf_forward(user_embedding, item_embedding, uid_batch, iid_batch)
    scores = jax.block_until_ready(scores)

    # Pure-JAX reference (same semantics as the PyTorch forward).
    ref = jnp.sum(user_embedding[uid_batch] * item_embedding[iid_batch], axis=1)
    assert scores.shape == (batch,)
    assert jnp.allclose(scores, ref, atol=1e-3, rtol=1e-3), (scores, ref)

    print("KERNEL_OK")
</pallas_src>

<mosaic_0001>
module attributes {stable_mosaic.version = 11 : i64} {
  func.func @_mf_kernel(%arg0: i32, %arg1: memref<1x1x128xi32, #tpu.memory_space<vmem>>, %arg2: memref<1x1x128xi32, #tpu.memory_space<vmem>>, %arg3: memref<32x128xf32, #tpu.memory_space<vmem>>, %arg4: memref<32x128xf32, #tpu.memory_space<vmem>>, %arg5: memref<1x1x128xf32, #tpu.memory_space<vmem>>) attributes {dimension_semantics = [#tpu.dimension_semantics<parallel>], iteration_bounds = array<i64: 1>, scalar_prefetch = 0 : i64, scratch_operands = 0 : i64, tpu.core_type = #tpu.core_type<tc>, window_params = [{transform_indices = @transform_0, window_bounds = array<i64: 1, 1, 128>}, {transform_indices = @transform_1, window_bounds = array<i64: 1, 1, 128>}, {pipeline_mode = #tpu.pipeline_mode<synchronous>, transform_indices = @transform_2, window_bounds = array<i64: 32, 128>}, {pipeline_mode = #tpu.pipeline_mode<synchronous>, transform_indices = @transform_3, window_bounds = array<i64: 32, 128>}, {transform_indices = @transform_4, window_bounds = array<i64: 1, 1, 128>}]} {
    %c0 = arith.constant 0 : index
    %c0_0 = arith.constant 0 : index
    %c0_1 = arith.constant 0 : index
    %0 = vector.load %arg1[%c0, %c0_0, %c0_1] : memref<1x1x128xi32, #tpu.memory_space<vmem>>, vector<1x1x128xi32>
    %1 = vector.shape_cast %0 : vector<1x1x128xi32> to vector<1x128xi32>
    %c0_2 = arith.constant 0 : index
    %c0_3 = arith.constant 0 : index
    %c0_4 = arith.constant 0 : index
    %2 = vector.load %arg2[%c0_2, %c0_3, %c0_4] : memref<1x1x128xi32, #tpu.memory_space<vmem>>, vector<1x1x128xi32>
    %3 = vector.shape_cast %2 : vector<1x1x128xi32> to vector<1x128xi32>
    %4 = tpu.iota {dimensions = array<i32: 0>} : vector<128x128xi32>
    %5 = vector.broadcast %1 : vector<1x128xi32> to vector<128x128xi32>
    %6 = arith.cmpi eq, %4, %5 : vector<128x128xi32>
    %7 = arith.extui %6 : vector<128x128xi1> to vector<128x128xi32>
    %8 = arith.sitofp %7 : vector<128x128xi32> to vector<128x128xf32>
    %9 = tpu.iota {dimensions = array<i32: 0>} : vector<128x128xi32>
    %10 = vector.broadcast %3 : vector<1x128xi32> to vector<128x128xi32>
    %11 = arith.cmpi eq, %9, %10 : vector<128x128xi32>
    %12 = arith.extui %11 : vector<128x128xi1> to vector<128x128xi32>
    %13 = arith.sitofp %12 : vector<128x128xi32> to vector<128x128xf32>
    %c0_5 = arith.constant 0 : index
    %c0_6 = arith.constant 0 : index
    %14 = vector.load %arg3[%c0_5, %c0_6] : memref<32x128xf32, #tpu.memory_space<vmem>>, vector<32x128xf32>
    %cst = arith.constant dense<0.000000e+00> : vector<32x128xf32>
    %15 = tpu.matmul %14, %8, %cst {dimension_numbers = #tpu.dot_dimension_numbers<[1], [0], [0], [1], [0, 0, 1, 1], [], []>} : vector<32x128xf32>, vector<128x128xf32>, vector<32x128xf32> -> vector<32x128xf32>
    %c0_7 = arith.constant 0 : index
    %c0_8 = arith.constant 0 : index
    %16 = vector.load %arg4[%c0_7, %c0_8] : memref<32x128xf32, #tpu.memory_space<vmem>>, vector<32x128xf32>
    %cst_9 = arith.constant dense<0.000000e+00> : vector<32x128xf32>
    %17 = tpu.matmul %16, %13, %cst_9 {dimension_numbers = #tpu.dot_dimension_numbers<[1], [0], [0], [1], [0, 0, 1, 1], [], []>} : vector<32x128xf32>, vector<128x128xf32>, vector<32x128xf32> -> vector<32x128xf32>
    %18 = arith.mulf %15, %17 : vector<32x128xf32>
    %cst_10 = arith.constant dense<0.000000e+00> : vector<128xf32>
    %19 = vector.multi_reduction <add>, %18, %cst_10 [0] : vector<32x128xf32> to vector<128xf32>
    %20 = vector.shape_cast %19 : vector<128xf32> to vector<1x128xf32>
    %21 = vector.shape_cast %20 : vector<1x128xf32> to vector<1x1x128xf32>
    %c0_11 = arith.constant 0 : index
    %c0_12 = arith.constant 0 : index
    %c0_13 = arith.constant 0 : index
    %22 = vector.load %arg5[%c0_11, %c0_12, %c0_13] : memref<1x1x128xf32, #tpu.memory_space<vmem>>, vector<1x1x128xf32>
    tpu.vector_store %arg5[%c0_11, %c0_12, %c0_13], %21 {strides = array<i32>} : memref<1x1x128xf32, #tpu.memory_space<vmem>>, vector<1x1x128xf32>,
    return
  }
  func.func @transform_0(%arg0: i32) -> (i32, i32, i32) {
    %c0_i32 = arith.constant 0 : i32
    %c0_i32_0 = arith.constant 0 : i32
    %c0_i32_1 = arith.constant 0 : i32
    return %arg0, %c0_i32, %c0_i32_0 : i32, i32, i32
  }
  func.func @transform_1(%arg0: i32) -> (i32, i32, i32) {
    %c0_i32 = arith.constant 0 : i32
    %c0_i32_0 = arith.constant 0 : i32
    %c0_i32_1 = arith.constant 0 : i32
    return %arg0, %c0_i32, %c0_i32_0 : i32, i32, i32
  }
  func.func @transform_2(%arg0: i32) -> (i32, i32) {
    %c0_i32 = arith.constant 0 : i32
    %c0_i32_0 = arith.constant 0 : i32
    %c0_i32_1 = arith.constant 0 : i32
    return %c0_i32, %c0_i32_0 : i32, i32
  }
  func.func @transform_3(%arg0: i32) -> (i32, i32) {
    %c0_i32 = arith.constant 0 : i32
    %c0_i32_0 = arith.constant 0 : i32
    %c0_i32_1 = arith.constant 0 : i32
    return %c0_i32, %c0_i32_0 : i32, i32
  }
  func.func @transform_4(%arg0: i32) -> (i32, i32, i32) {
    %c0_i32 = arith.constant 0 : i32
    %c0_i32_0 = arith.constant 0 : i32
    %c0_i32_1 = arith.constant 0 : i32
    return %arg0, %c0_i32, %c0_i32_0 : i32, i32, i32
  }
}

</mosaic_0001>

<llo_original>
// kernel: mf_forward.1
$region0: #{mf_forward.1}
  #allocation0 [shape = 'u32[]', space=smem, size = 0x4, offset = 0x4, fixed_abs, tag = 'smem constant byte address 0x4 - core index']
  #allocation1 [shape = 'u32[144,128]{1,0:T(1,128)}', space=vmem, size = 0x12000, scoped, tag = 'internal scratch']
  %s0 = inlined_call_operand.vmem [shape: s32[1,1,128], index: 0, kind: input, shape index: {}]
  %s1 = inlined_call_operand.vmem [shape: s32[1,1,128], index: 1, kind: input, shape index: {}]
  %s2 = inlined_call_operand.vmem [shape: f32[32,128], index: 2, kind: input, shape index: {}]
  %s3 = inlined_call_operand.vmem [shape: f32[32,128], index: 3, kind: input, shape index: {}]
  %s4 = inlined_call_operand.vmem [shape: f32[1,1,128], index: 4, kind: output, shape index: {}]
  %s5 = sld [smem:[#allocation0]]
  $region26: #{mf_forward.1} parent=0
    _
  %s7 = ssub.s32 1, %s5
  %s8 = scalar_select 0, %s7, %s5
  // Predicated region
  $region2: #{mf_forward.1} parent=0 // pred_check
    _
  $region3: #{mf_forward.1} parent=0 // pred_check_branch
    %10 = sbr.rel (0) target = $region5
  $region4: #{mf_forward.1} parent=0 // pred_region
    _
  $region5: #{mf_forward.1} parent=0 // pred_fallthru
    _
  // Predicated region
  $region6: #{mf_forward.1} parent=0 // pred_check
    _
  $region7: #{mf_forward.1} parent=0 // pred_check_branch
    %12 = sbr.rel (0) target = $region9
  $region8: #{mf_forward.1} parent=0 // pred_region
    _
  $region9: #{mf_forward.1} parent=0 // pred_fallthru
    _
  // Predicated region
  $region10: #{mf_forward.1} parent=0 // pred_check
    _
  $region11: #{mf_forward.1} parent=0 // pred_check_branch
    %14 = sbr.rel (0) target = $region13
  $region12: #{mf_forward.1} parent=0 // pred_region
    _
  $region13: #{mf_forward.1} parent=0 // pred_fallthru
    _
  // Predicated region
  $region14: #{mf_forward.1} parent=0 // pred_check
    _
  $region15: #{mf_forward.1} parent=0 // pred_check_branch
    %16 = sbr.rel (0) target = $region17
  $region16: #{mf_forward.1} parent=0 // pred_region
    _
  $region17: #{mf_forward.1} parent=0 // pred_fallthru
    _
  %v17 = vld [vmem:[%s0] sm:$0x1]
  %v18 = vld [vmem:[%s1] sm:$0x1]
  %v19 = vlaneseq
  %v20 = vshrl.u32 %v19, 7
  %v21 = vadd.s32 %v20, 8
  %v22 = vadd.s32 %v20, 16
  %v23 = vadd.s32 %v20, 24
  %v24 = vadd.s32 %v20, 32
  %v25 = vadd.s32 %v20, 40
  %v26 = vadd.s32 %v20, 48
  %v27 = vadd.s32 %v20, 56
  %v28 = vadd.s32 %v20, 64
  %v29 = vadd.s32 %v20, 72
  %v30 = vadd.s32 %v20, 80
  %v31 = vadd.s32 %v20, 88
  %v32 = vadd.s32 %v20, 96
  %v33 = vadd.s32 %v20, 104
  %v34 = vadd.s32 %v20, 112
  %v35 = vadd.s32 %v20, 120
  %v36 = vlaneseq
  %v37 = vshrl.u32 %v36, 7
  %v38 = vsub.s32 0, %v37
  %v39 = vrot.slane %v17, %v38
  %vm40 = vcmp.eq.s32.totalorder %v20, %v39
  %vm41 = vcmp.eq.s32.totalorder %v21, %v39
  %vm42 = vcmp.eq.s32.totalorder %v22, %v39
  %vm43 = vcmp.eq.s32.totalorder %v23, %v39
  %vm44 = vcmp.eq.s32.totalorder %v24, %v39
  %vm45 = vcmp.eq.s32.totalorder %v25, %v39
  %vm46 = vcmp.eq.s32.totalorder %v26, %v39
  %vm47 = vcmp.eq.s32.totalorder %v27, %v39
  %vm48 = vcmp.eq.s32.totalorder %v28, %v39
  %vm49 = vcmp.eq.s32.totalorder %v29, %v39
  %vm50 = vcmp.eq.s32.totalorder %v30, %v39
  %vm51 = vcmp.eq.s32.totalorder %v31, %v39
  %vm52 = vcmp.eq.s32.totalorder %v32, %v39
  %vm53 = vcmp.eq.s32.totalorder %v33, %v39
  %vm54 = vcmp.eq.s32.totalorder %v34, %v39
  %vm55 = vcmp.eq.s32.totalorder %v35, %v39
  %v56 = vsel %vm40, 1, 0
  %v57 = vsel %vm41, 1, 0
  %v58 = vsel %vm42, 1, 0
  %v59 = vsel %vm43, 1, 0
  %v60 = vsel %vm44, 1, 0
  %v61 = vsel %vm45, 1, 0
  %v62 = vsel %vm46, 1, 0
  %v63 = vsel %vm47, 1, 0
  %v64 = vsel %vm48, 1, 0
  %v65 = vsel %vm49, 1, 0
  %v66 = vsel %vm50, 1, 0
  %v67 = vsel %vm51, 1, 0
  %v68 = vsel %vm52, 1, 0
  %v69 = vsel %vm53, 1, 0
  %v70 = vsel %vm54, 1, 0
  %v71 = vsel %vm55, 1, 0
  %v72 = vcvt.s32.f32 %v56
  %v73 = vcvt.s32.f32 %v57
  %v74 = vcvt.s32.f32 %v58
  %v75 = vcvt.s32.f32 %v59
  %v76 = vcvt.s32.f32 %v60
  %v77 = vcvt.s32.f32 %v61
  %v78 = vcvt.s32.f32 %v62
  %v79 = vcvt.s32.f32 %v63
  %v80 = vcvt.s32.f32 %v64
  %v81 = vcvt.s32.f32 %v65
  %v82 = vcvt.s32.f32 %v66
  %v83 = vcvt.s32.f32 %v67
  %v84 = vcvt.s32.f32 %v68
  %v85 = vcvt.s32.f32 %v69
  %v86 = vcvt.s32.f32 %v70
  %v87 = vcvt.s32.f32 %v71
  %v88 = vlaneseq
  %v89 = vshrl.u32 %v88, 7
  %v90 = vsub.s32 0, %v89
  %v91 = vrot.slane %v18, %v90
  %vm92 = vcmp.eq.s32.totalorder %v20, %v91
  %vm93 = vcmp.eq.s32.totalorder %v21, %v91
  %vm94 = vcmp.eq.s32.totalorder %v22, %v91
  %vm95 = vcmp.eq.s32.totalorder %v23, %v91
  %vm96 = vcmp.eq.s32.totalorder %v24, %v91
  %vm97 = vcmp.eq.s32.totalorder %v25, %v91
  %vm98 = vcmp.eq.s32.totalorder %v26, %v91
  %vm99 = vcmp.eq.s32.totalorder %v27, %v91
  %vm100 = vcmp.eq.s32.totalorder %v28, %v91
  %vm101 = vcmp.eq.s32.totalorder %v29, %v91
  %vm102 = vcmp.eq.s32.totalorder %v30, %v91
  %vm103 = vcmp.eq.s32.totalorder %v31, %v91
  %vm104 = vcmp.eq.s32.totalorder %v32, %v91
  %vm105 = vcmp.eq.s32.totalorder %v33, %v91
  %vm106 = vcmp.eq.s32.totalorder %v34, %v91
  %vm107 = vcmp.eq.s32.totalorder %v35, %v91
  %v108 = vsel %vm92, 1, 0
  %v109 = vsel %vm93, 1, 0
  %v110 = vsel %vm94, 1, 0
  %v111 = vsel %vm95, 1, 0
  %v112 = vsel %vm96, 1, 0
  %v113 = vsel %vm97, 1, 0
  %v114 = vsel %vm98, 1, 0
  %v115 = vsel %vm99, 1, 0
  %v116 = vsel %vm100, 1, 0
  %v117 = vsel %vm101, 1, 0
  %v118 = vsel %vm102, 1, 0
  %v119 = vsel %vm103, 1, 0
  %v120 = vsel %vm104, 1, 0
  %v121 = vsel %vm105, 1, 0
  %v122 = vsel %vm106, 1, 0
  %v123 = vsel %vm107, 1, 0
  %v124 = vcvt.s32.f32 %v108
  %v125 = vcvt.s32.f32 %v109
  %v126 = vcvt.s32.f32 %v110
  %v127 = vcvt.s32.f32 %v111
  %v128 = vcvt.s32.f32 %v112
  %v129 = vcvt.s32.f32 %v113
  %v130 = vcvt.s32.f32 %v114
  %v131 = vcvt.s32.f32 %v115
  %v132 = vcvt.s32.f32 %v116
  %v133 = vcvt.s32.f32 %v117
  %v134 = vcvt.s32.f32 %v118
  %v135 = vcvt.s32.f32 %v119
  %v136 = vcvt.s32.f32 %v120
  %v137 = vcvt.s32.f32 %v121
  %v138 = vcvt.s32.f32 %v122
  %v139 = vcvt.s32.f32 %v123
  %v140 = vld [vmem:[%s2] sm:$0xff]
  %v141 = vld [vmem:[%s2 + $0x8] sm:$0xff]
  %v142 = vld [vmem:[%s2 + $0x10] sm:$0xff]
  %v143 = vld [vmem:[%s2 + $0x18] sm:$0xff]
  %144 = vmatprep.subr.mxu0 0.0
  %145 = vmatpush1.msra.mxu0 %v72
  %146 = vmatprep.subr.mxu0 0.0
  %147 = vmatpush1.msra.mxu0 %v73
  %148 = vmatprep.subr.mxu0 0.0
  %149 = vmatpush1.msra.mxu0 %v74
  %150 = vmatprep.subr.mxu0 0.0
  %151 = vmatpush1.msra.mxu0 %v75
  %152 = vmatprep.subr.mxu0 0.0
  %153 = vmatpush1.msra.mxu0 %v76
  %154 = vmatprep.subr.mxu0 0.0
  %155 = vmatpush1.msra.mxu0 %v77
  %156 = vmatprep.subr.mxu0 0.0
  %157 = vmatpush1.msra.mxu0 %v78
  %158 = vmatprep.subr.mxu0 0.0
  %159 = vmatpush1.msra.mxu0 %v79
  %160 = vmatprep.subr.mxu0 0.0
  %161 = vmatpush1.msra.mxu0 %v80
  %162 = vmatprep.subr.mxu0 0.0
  %163 = vmatpush1.msra.mxu0 %v81
  %164 = vmatprep.subr.mxu0 0.0
  %165 = vmatpush1.msra.mxu0 %v82
  %166 = vmatprep.subr.mxu0 0.0
  %167 = vmatpush1.msra.mxu0 %v83
  %168 = vmatprep.subr.mxu0 0.0
  %169 = vmatpush1.msra.mxu0 %v84
  %170 = vmatprep.subr.mxu0 0.0
  %171 = vmatpush1.msra.mxu0 %v85
  %172 = vmatprep.subr.mxu0 0.0
  %173 = vmatpush1.msra.mxu0 %v86
  %174 = vmatprep.subr.mxu0 0.0
  %175 = vmatpush1.msra.mxu0 %v87
  %176 = vmatprep.subr.mxu0 0.0
  %177 = vmatpush1.msra.mxu0 0.0
  %178 = vmatprep.subr.mxu0 0.0
  %179 = vmatpush1.msra.mxu0 0.0
  %180 = vmatprep.subr.mxu0 0.0
  %181 = vmatpush1.msra.mxu0 0.0
  %182 = vmatprep.subr.mxu0 0.0
  %183 = vmatpush1.msra.mxu0 0.0
  %184 = vmatprep.subr.mxu0 0.0
  %185 = vmatpush1.msra.mxu0 0.0
  %186 = vmatprep.subr.mxu0 0.0
  %187 = vmatpush1.msra.mxu0 0.0
  %188 = vmatprep.subr.mxu0 0.0
  %189 = vmatpush1.msra.mxu0 0.0
  %190 = vmatprep.subr.mxu0 0.0
  %191 = vmatpush1.msra.mxu0 0.0
  %192 = vmatprep.subr.mxu0 0.0
  %193 = vmatpush1.msra.mxu0 0.0
  %194 = vmatprep.subr.mxu0 0.0
  %195 = vmatpush1.msra.mxu0 0.0
  %196 = vmatprep.subr.mxu0 0.0
  %197 = vmatpush1.msra.mxu0 0.0
  %198 = vmatprep.subr.mxu0 0.0
  %199 = vmatpush1.msra.mxu0 0.0
  %200 = vmatprep.subr.mxu0 0.0
  %201 = vmatpush1.msra.mxu0 0.0
  %202 = vmatprep.subr.mxu0 0.0
  %203 = vmatpush1.msra.mxu0 0.0
  %204 = vmatprep.subr.mxu0 0.0
  %205 = vmatpush1.msra.mxu0 0.0
  %206 = vmatprep.subr.mxu0 0.0
  %207 = vmatpush1.msra.mxu0 0.0
  %208 = vmatprep.mubr.f32.mxu0 0.0
  %209 = vmatmul.mubr.f32.gmra.mrb[0].mxu0 %v140
  %v210 = vpop.f32.mrb[0].mxu0
  %v211 = vadd.f32 0.0, %v210
  %v212 = vpop.f32.mrb[0].mxu0
  %213 = vmatprep.mubr.f32.mxu0 0.0
  %214 = vmatmul.mubr.f32.gmra.mrb[0].mxu0 %v141
  %v215 = vpop.f32.mrb[0].mxu0
  %v216 = vadd.f32 0.0, %v215
  %v217 = vpop.f32.mrb[0].mxu0
  %218 = vmatprep.mubr.f32.mxu0 0.0
  %219 = vmatmul.mubr.f32.gmra.mrb[0].mxu0 %v142
  %v220 = vpop.f32.mrb[0].mxu0
  %v221 = vadd.f32 0.0, %v220
  %v222 = vpop.f32.mrb[0].mxu0
  %223 = vmatprep.mubr.f32.mxu0 0.0
  %224 = vmatmul.mubr.f32.gmra.mrb[0].mxu0 %v143
  %v225 = vpop.f32.mrb[0].mxu0
  %v226 = vadd.f32 0.0, %v225
  %v227 = vpop.f32.mrb[0].mxu0
  %228 = vdwg.mxu0
  %v229 = vld [vmem:[%s3] sm:$0xff]
  %v230 = vld [vmem:[%s3 + $0x8] sm:$0xff]
  %v231 = vld [vmem:[%s3 + $0x10] sm:$0xff]
  %v232 = vld [vmem:[%s3 + $0x18] sm:$0xff]
  %233 = vmatprep.subr.mxu0 0.0
  %234 = vmatpush1.msra.mxu0 %v124
  %235 = vmatprep.subr.mxu0 0.0
  %236 = vmatpush1.msra.mxu0 %v125
  %237 = vmatprep.subr.mxu0 0.0
  %238 = vmatpush1.msra.mxu0 %v126
  %239 = vmatprep.subr.mxu0 0.0
  %240 = vmatpush1.msra.mxu0 %v127
  %241 = vmatprep.subr.mxu0 0.0
  %242 = vmatpush1.msra.mxu0 %v128
  %243 = vmatprep.subr.mxu0 0.0
  %244 = vmatpush1.msra.mxu0 %v129
  %245 = vmatprep.subr.mxu0 0.0
  %246 = vmatpush1.msra.mxu0 %v130
  %247 = vmatprep.subr.mxu0 0.0
  %248 = vmatpush1.msra.mxu0 %v131
  %249 = vmatprep.subr.mxu0 0.0
  %250 = vmatpush1.msra.mxu0 %v132
  %251 = vmatprep.subr.mxu0 0.0
  %252 = vmatpush1.msra.mxu0 %v133
  %253 = vmatprep.subr.mxu0 0.0
  %254 = vmatpush1.msra.mxu0 %v134
  %255 = vmatprep.subr.mxu0 0.0
  %256 = vmatpush1.msra.mxu0 %v135
  %257 = vmatprep.subr.mxu0 0.0
  %258 = vmatpush1.msra.mxu0 %v136
  %259 = vmatprep.subr.mxu0 0.0
  %260 = vmatpush1.msra.mxu0 %v137
  %261 = vmatprep.subr.mxu0 0.0
  %262 = vmatpush1.msra.mxu0 %v138
  %263 = vmatprep.subr.mxu0 0.0
  %264 = vmatpush1.msra.mxu0 %v139
  %265 = vmatprep.subr.mxu0 0.0
  %266 = vmatpush1.msra.mxu0 0.0
  %267 = vmatprep.subr.mxu0 0.0
  %268 = vmatpush1.msra.mxu0 0.0
  %269 = vmatprep.subr.mxu0 0.0
  %270 = vmatpush1.msra.mxu0 0.0
  %271 = vmatprep.subr.mxu0 0.0
  %272 = vmatpush1.msra.mxu0 0.0
  %273 = vmatprep.subr.mxu0 0.0
  %274 = vmatpush1.msra.mxu0 0.0
  %275 = vmatprep.subr.mxu0 0.0
  %276 = vmatpush1.msra.mxu0 0.0
  %277 = vmatprep.subr.mxu0 0.0
  %278 = vmatpush1.msra.mxu0 0.0
  %279 = vmatprep.subr.mxu0 0.0
  %280 = vmatpush1.msra.mxu0 0.0
  %281 = vmatprep.subr.mxu0 0.0
  %282 = vmatpush1.msra.mxu0 0.0
  %283 = vmatprep.subr.mxu0 0.0
  %284 = vmatpush1.msra.mxu0 0.0
  %285 = vmatprep.subr.mxu0 0.0
  %286 = vmatpush1.msra.mxu0 0.0
  %287 = vmatprep.subr.mxu0 0.0
  %288 = vmatpush1.msra.mxu0 0.0
  %289 = vmatprep.subr.mxu0 0.0
  %290 = vmatpush1.msra.mxu0 0.0
  %291 = vmatprep.subr.mxu0 0.0
  %292 = vmatpush1.msra.mxu0 0.0
  %293 = vmatprep.subr.mxu0 0.0
  %294 = vmatpush1.msra.mxu0 0.0
  %295 = vmatprep.subr.mxu0 0.0
  %296 = vmatpush1.msra.mxu0 0.0
  %297 = vmatprep.mubr.f32.mxu0 0.0
  %298 = vmatmul.mubr.f32.gmra.mrb[0].mxu0 %v229
  %v299 = vpop.f32.mrb[0].mxu0
  %v300 = vadd.f32 0.0, %v299
  %v301 = vpop.f32.mrb[0].mxu0
  %302 = vmatprep.mubr.f32.mxu0 0.0
  %303 = vmatmul.mubr.f32.gmra.mrb[0].mxu0 %v230
  %v304 = vpop.f32.mrb[0].mxu0
  %v305 = vadd.f32 0.0, %v304
  %v306 = vpop.f32.mrb[0].mxu0
  %307 = vmatprep.mubr.f32.mxu0 0.0
  %308 = vmatmul.mubr.f32.gmra.mrb[0].mxu0 %v231
  %v309 = vpop.f32.mrb[0].mxu0
  %v310 = vadd.f32 0.0, %v309
  %v311 = vpop.f32.mrb[0].mxu0
  %312 = vmatprep.mubr.f32.mxu0 0.0
  %313 = vmatmul.mubr.f32.gmra.mrb[0].mxu0 %v232
  %v314 = vpop.f32.mrb[0].mxu0
  %v315 = vadd.f32 0.0, %v314
  %v316 = vpop.f32.mrb[0].mxu0
  %317 = vdwg.mxu0
  %v318 = vmul.f32 %v211, %v300
  %v319 = vmul.f32 %v216, %v305
  %v320 = vmul.f32 %v221, %v310
  %v321 = vmul.f32 %v226, %v315
  %v322 = vadd.f32 %v318, %v319
  %v323 = vadd.f32 %v322, %v320
  %v324 = vadd.f32 %v323, %v321
  %v325 = vrot.slane %v324, 4
  %v326 = vadd.f32 %v324, %v325
  %v327 = vrot.slane %v326, 2
  %v328 = vadd.f32 %v326, %v327
  %v329 = vrot.slane %v328, 1
  %v330 = vadd.f32 %v328, %v329
  %331 = vst [vmem:[%s4] sm:$0x1] %v330
  // Predicated region
  $region18: #{mf_forward.1} parent=0 // pred_check
    _
  $region19: #{mf_forward.1} parent=0 // pred_check_branch
    %333 = sbr.rel (0) target = $region21
  $region20: #{mf_forward.1} parent=0 // pred_region
    _
  $region21: #{mf_forward.1} parent=0 // pred_fallthru
    _
  // Predicated region
  $region22: #{mf_forward.1} parent=0 // pred_check
    _
  $region23: #{mf_forward.1} parent=0 // pred_check_branch
    %335 = sbr.rel (0) target = $region25
  $region24: #{mf_forward.1} parent=0 // pred_region
    _
  $region25: #{mf_forward.1} parent=0 // pred_fallthru
    _

</llo_original>
